<compile_context>
chip_gen: v6e
topology: v6e:2x2x1
jax: 0.10.0
libtpu: 0.0.40
codegen_flags: <defaults>
</compile_context>

<pallas_src>
import jax
import jax.numpy as jnp
from jax import lax
from jax.experimental import pallas as pl
from jax.experimental.pallas import tpu as pltpu


def _round_up(v, m):
    return ((v + m - 1) // m) * m


def _choose_tile(dim, max_tile, align):
    """Pick (tile, padded_dim).

    If the whole dimension fits in one tile, use the full extent (no padding
    and no alignment requirement).  Otherwise prefer an `align`-multiple tile
    that divides `dim` exactly (no padding); fall back to padding only when no
    such divisor exists.
    """
    if dim <= max_tile:
        return dim, dim
    base = (max_tile // align) * align
    for t in range(base, align - 1, -align):
        if dim % t == 0:
            return t, dim
    return base, _round_up(dim, base)


def _head_kernel_single_k(x_ref, w_ref, b_ref, o_ref):
    # x_ref: (tm, K) activations; w_ref: (tn, K) weight (no transpose);
    # b_ref: (1, tn) bias; o_ref: (tm, tn) output.
    acc = lax.dot_general(
        x_ref[...], w_ref[...],
        dimension_numbers=(((1,), (1,)), ((), ())),   # x @ W^T
        preferred_element_type=jnp.float32,
    )
    o_ref[...] = (acc + b_ref[...].astype(jnp.float32)).astype(o_ref.dtype)


def _head_kernel_multi_k(x_ref, w_ref, b_ref, o_ref, acc_ref):
    # Same as above but with a VMEM f32 accumulator resident across the K axis.
    k = pl.program_id(2)

    @pl.when(k == 0)
    def _():
        acc_ref[...] = jnp.zeros_like(acc_ref)

    acc_ref[...] += lax.dot_general(
        x_ref[...], w_ref[...],
        dimension_numbers=(((1,), (1,)), ((), ())),   # x @ W^T
        preferred_element_type=jnp.float32,
    )

    @pl.when(k == pl.num_programs(2) - 1)
    def _():
        o_ref[...] = (acc_ref[...] + b_ref[...].astype(jnp.float32)).astype(o_ref.dtype)


def transformer_basic_head(x, weight, bias):
    """x: (N, dim_in), weight: (num_classes, dim_in), bias: (num_classes,)."""
    n, dim_in = x.shape
    num_classes, dim_in_w = weight.shape
    assert dim_in_w == dim_in
    out_dtype = x.dtype

    in_item = jnp.dtype(x.dtype).itemsize
    w_item = jnp.dtype(weight.dtype).itemsize
    out_item = jnp.dtype(out_dtype).itemsize
    sublane = {4: 8, 2: 16, 1: 32}.get(out_item, 8)

    # --- generation-aware VMEM budget -------------------------------------
    try:
        vmem_cap = int(pltpu.get_tpu_info().vmem_capacity_bytes)
    except Exception:
        vmem_cap = 64 * 1024 * 1024            # conservative (v7x-sized)
    dual_tc_likely = vmem_cap <= 64 * 1024 * 1024   # v7x: 64 MiB VMEM, 2 TCs

    max_tm = 512
    max_tk = 2048
    max_tn = 1024 if dual_tc_likely else 2048   # (tn,tk)=(2048,2048) f32 fits v5e/v6e only

    # --- tile selection (prefer no padding) --------------------------------
    tm, mp = _choose_tile(n, max_tm, sublane)
    tn, cp = _choose_tile(num_classes, max_tn, 128)
    tk, kp = _choose_tile(dim_in, max_tk, 128)

    # Ensure >=2 parallel output tiles on dual-TC chips (only when the split
    # keeps lane alignment and introduces no padding).
    if dual_tc_likely and (mp // tm) * (cp // tn) == 1 and tn % 256 == 0:
        tn //= 2

    grid_m, grid_n, grid_k = mp // tm, cp // tn, kp // tk
    multi_k = grid_k > 1

    # --- pad only if unavoidable (zeros are inert for the contraction) ----
    xp = x if (mp == n and kp == dim_in) else jnp.pad(
        x, ((0, mp - n), (0, kp - dim_in)))
    wp = weight if (cp == num_classes and kp == dim_in) else jnp.pad(
        weight, ((0, cp - num_classes), (0, kp - dim_in)))
    bp = bias if cp == num_classes else jnp.pad(bias, (0, cp - num_classes))
    b2 = bp.reshape(1, cp)

    # --- VMEM footprint (double-buffered in/out + resident accumulator) ---
    footprint = (2 * tm * tk * in_item          # x tiles
                 + 2 * tn * tk * w_item         # weight tiles (dominant stream)
                 + 2 * tn * 8                   # bias tiles
                 + 2 * tm * tn * out_item       # output tiles
                 + (tm * tn * 4 if multi_k else 0))
    vmem_limit = int(min(max(footprint + (4 << 20), 16 << 20), vmem_cap))

    if not multi_k:
        out_padded = pl.pallas_call(
            _head_kernel_single_k,
            out_shape=jax.ShapeDtypeStruct((mp, cp), out_dtype),
            grid_spec=pltpu.PrefetchScalarGridSpec(
                num_scalar_prefetch=0,
                grid=(grid_m, grid_n),
                in_specs=[
                    pl.BlockSpec((tm, tk), lambda i, j: (i, 0)),   # x
                    pl.BlockSpec((tn, tk), lambda i, j: (j, 0)),   # weight
                    pl.BlockSpec((1, tn), lambda i, j: (0, j)),    # bias
                ],
                out_specs=pl.BlockSpec((tm, tn), lambda i, j: (i, j)),
            ),
            compiler_params=pltpu.CompilerParams(
                dimension_semantics=("parallel", "parallel"),
                vmem_limit_bytes=vmem_limit,
            ),
        )(xp, wp, b2)
    else:
        out_padded = pl.pallas_call(
            _head_kernel_multi_k,
            out_shape=jax.ShapeDtypeStruct((mp, cp), out_dtype),
            grid_spec=pltpu.PrefetchScalarGridSpec(
                num_scalar_prefetch=0,
                grid=(grid_m, grid_n, grid_k),
                in_specs=[
                    pl.BlockSpec((tm, tk), lambda i, j, k: (i, k)),   # x
                    pl.BlockSpec((tn, tk), lambda i, j, k: (j, k)),   # weight
                    pl.BlockSpec((1, tn), lambda i, j, k: (0, j)),    # bias
                ],
                out_specs=pl.BlockSpec((tm, tn), lambda i, j, k: (i, j)),
                scratch_shapes=[pltpu.VMEM((tm, tn), jnp.float32)],
            ),
            compiler_params=pltpu.CompilerParams(
                dimension_semantics=("parallel", "parallel", "arbitrary"),
                vmem_limit_bytes=vmem_limit,
            ),
        )(xp, wp, b2)

    if mp == n and cp == num_classes:
        return out_padded
    return out_padded[:n, :num_classes]


if __name__ == "__main__":
    # Small shapes consistent with the head: 8 tokens, dim_in=32, num_classes=16
    N, DIM_IN, NUM_CLASSES = 8, 32, 16

    key = jax.random.PRNGKey(0)
    kx, kw, kb = jax.random.split(key, 3)

    x = jax.random.normal(kx, (N, DIM_IN), dtype=jnp.float32)
    # Deterministic parameter init (mimics nn.Linear uniform(-1/sqrt(dim_in), 1/sqrt(dim_in)))
    bound = 1.0 / (DIM_IN ** 0.5)
    weight = jax.random.uniform(kw, (NUM_CLASSES, DIM_IN), minval=-bound, maxval=bound,
                                dtype=jnp.float32)
    bias = jax.random.uniform(kb, (NUM_CLASSES,), minval=-bound, maxval=bound,
                              dtype=jnp.float32)

    out = transformer_basic_head(x, weight, bias)
    out = jax.block_until_ready(out)

    # Reference check against plain JAX
    ref = x @ weight.T + bias
    assert out.shape == (N, NUM_CLASSES)
    assert jnp.allclose(out, ref, atol=1e-5, rtol=1e-5)

    print("KERNEL_OK")
</pallas_src>

<mosaic_0001>
module attributes {stable_mosaic.version = 11 : i64} {
  func.func @_head_kernel_single_k(%arg0: i32, %arg1: i32, %arg2: memref<8x32xf32, #tpu.memory_space<vmem>>, %arg3: memref<16x32xf32, #tpu.memory_space<vmem>>, %arg4: memref<1x16xf32, #tpu.memory_space<vmem>>, %arg5: memref<8x16xf32, #tpu.memory_space<vmem>>) attributes {dimension_semantics = [#tpu.dimension_semantics<parallel>, #tpu.dimension_semantics<parallel>], iteration_bounds = array<i64: 1, 1>, scalar_prefetch = 0 : i64, scratch_operands = 0 : i64, tpu.core_type = #tpu.core_type<tc>, window_params = [{transform_indices = @transform_0, window_bounds = array<i64: 8, 32>}, {transform_indices = @transform_1, window_bounds = array<i64: 16, 32>}, {transform_indices = @transform_2, window_bounds = array<i64: 1, 16>}, {transform_indices = @transform_3, window_bounds = array<i64: 8, 16>}]} {
    %c0 = arith.constant 0 : index
    %c0_0 = arith.constant 0 : index
    %0 = vector.load %arg2[%c0, %c0_0] : memref<8x32xf32, #tpu.memory_space<vmem>>, vector<8x32xf32>
    %c0_1 = arith.constant 0 : index
    %c0_2 = arith.constant 0 : index
    %1 = vector.load %arg3[%c0_1, %c0_2] : memref<16x32xf32, #tpu.memory_space<vmem>>, vector<16x32xf32>
    %cst = arith.constant dense<0.000000e+00> : vector<8x16xf32>
    %2 = tpu.matmul %0, %1, %cst {dimension_numbers = #tpu.dot_dimension_numbers<[1], [1], [0], [0], [0, 0, 1, 0], [], []>} : vector<8x32xf32>, vector<16x32xf32>, vector<8x16xf32> -> vector<8x16xf32>
    %c0_3 = arith.constant 0 : index
    %c0_4 = arith.constant 0 : index
    %3 = vector.load %arg4[%c0_3, %c0_4] : memref<1x16xf32, #tpu.memory_space<vmem>>, vector<1x16xf32>
    %4 = vector.broadcast %3 : vector<1x16xf32> to vector<8x16xf32>
    %5 = arith.addf %2, %4 : vector<8x16xf32>
    %c0_5 = arith.constant 0 : index
    %c0_6 = arith.constant 0 : index
    %6 = vector.load %arg5[%c0_5, %c0_6] : memref<8x16xf32, #tpu.memory_space<vmem>>, vector<8x16xf32>
    tpu.vector_store %arg5[%c0_5, %c0_6], %5 {strides = array<i32>} : memref<8x16xf32, #tpu.memory_space<vmem>>, vector<8x16xf32>,
    return
  }
  func.func @transform_0(%arg0: i32, %arg1: i32) -> (i32, i32) {
    %c0_i32 = arith.constant 0 : i32
    %c0_i32_0 = arith.constant 0 : i32
    return %arg0, %c0_i32 : i32, i32
  }
  func.func @transform_1(%arg0: i32, %arg1: i32) -> (i32, i32) {
    %c0_i32 = arith.constant 0 : i32
    %c0_i32_0 = arith.constant 0 : i32
    return %arg1, %c0_i32 : i32, i32
  }
  func.func @transform_2(%arg0: i32, %arg1: i32) -> (i32, i32) {
    %c0_i32 = arith.constant 0 : i32
    %c0_i32_0 = arith.constant 0 : i32
    return %c0_i32, %arg1 : i32, i32
  }
  func.func @transform_3(%arg0: i32, %arg1: i32) -> (i32, i32) {
    %c0_i32 = arith.constant 0 : i32
    return %arg0, %arg1 : i32, i32
  }
}

</mosaic_0001>

<llo_original>
// kernel: tpu_custom_call.1
$region0: #{tpu_custom_call.1}
  #allocation0 [shape = 'u32[]', space=smem, size = 0x4, offset = 0x4, fixed_abs, tag = 'smem constant byte address 0x4 - core index']
  #allocation1 [shape = 'u32[144,128]{1,0:T(1,128)}', space=vmem, size = 0x12000, scoped, tag = 'internal scratch']
  %s0 = inlined_call_operand.hbm [shape: f32[8,32], index: 0, kind: input, shape index: {}]
  %s1 = inlined_call_operand.hbm [shape: f32[16,32], index: 1, kind: input, shape index: {}]
  %s2 = inlined_call_operand.vmem [shape: f32[1,16], index: 2, kind: input, shape index: {}]
  %s3 = inlined_call_operand.hbm [shape: f32[8,16], index: 3, kind: output, shape index: {}]
  %s4 = sld [smem:[#allocation0]]
  $region30: #{tpu_custom_call.1} parent=0
    _
  %s6 = ssub.s32 1, %s4
  %s7 = scalar_select 0, %s6, %s4
  $region1: #{tpu_custom_call.1} parent=0
    #allocation2 [shape = 'u8[4096]{0}', space=vmem, size = 0x1000, scoped, tag = 'input window, operand 0, single buffered']
    #allocation3 [shape = 's32[1]{0}', space=sflag, size = 0x4, scoped, tag = 'scoped memory for tpu_custom_call.1']
    #allocation4 [shape = 's32[1]{0}', space=sflag, size = 0x4, scoped, tag = 'scoped memory for tpu_custom_call.1']
    #allocation5 [shape = 'u8[8192]{0}', space=vmem, size = 0x2000, scoped, tag = 'input window, operand 1, single buffered']
    #allocation6 [shape = 's32[1]{0}', space=sflag, size = 0x4, scoped, tag = 'scoped memory for tpu_custom_call.1']
    #allocation7 [shape = 'u8[4096]{0}', space=vmem, size = 0x1000, scoped, tag = 'output window, operand 0, single buffered']
    %8 = vsyncpa [#allocation3], 0
    %9 = vsyncpa [#allocation6], 0
    %10 = vsyncpa [#allocation4], 0
    // Predicated region
    $region2: #{tpu_custom_call.1} parent=1 // pred_check
      _
    $region3: #{tpu_custom_call.1} parent=1 // pred_check_branch
      %12 = sbr.rel (0) target = $region5
    $region4: #{tpu_custom_call.1} parent=1 // pred_region
      %s14 = ssub.s32 128, 128
      %15 = vsyncadd [#allocation3], %s14
      %s17 = sshll.u32 [#allocation2], 4
      %s18 = int_to_ptr.vmem [resolvable:$true] %s17
      %20 = dma.hbm_to_vmem [thread:$0]  %s0, 128, %s18, [#allocation3]
    $region5: #{tpu_custom_call.1} parent=1 // pred_fallthru
      _
    // Predicated region
    $region6: #{tpu_custom_call.1} parent=1 // pred_check
      _
    $region7: #{tpu_custom_call.1} parent=1 // pred_check_branch
      %22 = sbr.rel (0) target = $region9
    $region8: #{tpu_custom_call.1} parent=1 // pred_region
      %s24 = ssub.s32 256, 256
      %25 = vsyncadd [#allocation6], %s24
      %s26 = sshll.u32 [#allocation5], 4
      %s27 = int_to_ptr.vmem [resolvable:$true] %s26
      %32 = dma.hbm_to_vmem [thread:$0]  %s1, 256, %s27, [#allocation6], 128, 128, 8
    $region9: #{tpu_custom_call.1} parent=1 // pred_fallthru
      _
    // Predicated region
    $region10: #{tpu_custom_call.1} parent=1 // pred_check
      _
    $region11: #{tpu_custom_call.1} parent=1 // pred_check_branch
      %34 = sbr.rel (0) target = $region13
    $region12: #{tpu_custom_call.1} parent=1 // pred_region
      _
    $region13: #{tpu_custom_call.1} parent=1 // pred_fallthru
      _
    // Predicated region
    $region14: #{tpu_custom_call.1} parent=1 // pred_check
      _
    $region15: #{tpu_custom_call.1} parent=1 // pred_check_branch
      %36 = sbr.rel (0) target = $region17
    $region16: #{tpu_custom_call.1} parent=1 // pred_region
      %37 = dma.done [#allocation3], 128
    $region17: #{tpu_custom_call.1} parent=1 // pred_fallthru
      _
    // Predicated region
    $region18: #{tpu_custom_call.1} parent=1 // pred_check
      _
    $region19: #{tpu_custom_call.1} parent=1 // pred_check_branch
      %39 = sbr.rel (0) target = $region21
    $region20: #{tpu_custom_call.1} parent=1 // pred_region
      %40 = dma.done [#allocation6], 256
    $region21: #{tpu_custom_call.1} parent=1 // pred_fallthru
      _
    %v41 = vld [vmem:[#allocation2] sm:$0xff]
    %v42 = vld [vmem:[#allocation5] sm:$0xff]
    %v43 = vld [vmem:[#allocation5 + $0x8] sm:$0xff]
    %v44 = vld [vmem:[%s2] sm:$0x1]
    %v46 = vlaneseq
    %v47 = vshrl.u32 %v46, 7
    %v48 = vsub.s32 0, %v47
    %v49 = vrot.slane %v44, %v48
    %vm51 = vcmask 261120
    %v53 = vsel %vm51, %v41, 0
    %v56 = vsel %vm51, %v42, 0
    %v59 = vsel %vm51, %v43, 0
    %61 = vmatprep.subr.mxu0 0.0
    %62 = vmatpush1.xpose.msra.mxu0 0.0
    %63 = vmatprep.subr.mxu0 0.0
    %64 = vmatpush1.xpose.msra.mxu0 0.0
    %65 = vmatprep.subr.mxu0 0.0
    %66 = vmatpush1.xpose.msra.mxu0 0.0
    %67 = vmatprep.subr.mxu0 0.0
    %68 = vmatpush1.xpose.msra.mxu0 0.0
    %69 = vmatprep.subr.mxu0 0.0
    %70 = vmatpush1.xpose.msra.mxu0 0.0
    %71 = vmatprep.subr.mxu0 0.0
    %72 = vmatpush1.xpose.msra.mxu0 0.0
    %73 = vmatprep.subr.mxu0 0.0
    %74 = vmatpush1.xpose.msra.mxu0 0.0
    %75 = vmatprep.subr.mxu0 0.0
    %76 = vmatpush1.xpose.msra.mxu0 0.0
    %77 = vmatprep.subr.mxu0 0.0
    %78 = vmatpush1.xpose.msra.mxu0 0.0
    %79 = vmatprep.subr.mxu0 0.0
    %80 = vmatpush1.xpose.msra.mxu0 0.0
    %81 = vmatprep.subr.mxu0 0.0
    %82 = vmatpush1.xpose.msra.mxu0 0.0
    %83 = vmatprep.subr.mxu0 0.0
    %84 = vmatpush1.xpose.msra.mxu0 0.0
    %85 = vmatprep.subr.mxu0 0.0
    %86 = vmatpush1.xpose.msra.mxu0 0.0
    %87 = vmatprep.subr.mxu0 0.0
    %88 = vmatpush1.xpose.msra.mxu0 0.0
    %89 = vmatprep.subr.mxu0 0.0
    %90 = vmatpush1.xpose.msra.mxu0 %v59
    %91 = vmatprep.subr.mxu0 0.0
    %92 = vmatpush1.xpose.msra.mxu0 %v56
    %93 = vmatprep.subr.mxu0 0.0
    %94 = vmatpush2.xpose.msra.mxu0 0.0
    %95 = vmatprep.subr.mxu0 0.0
    %96 = vmatpush2.xpose.msra.mxu0 0.0
    %97 = vmatprep.subr.mxu0 0.0
    %98 = vmatpush2.xpose.msra.mxu0 0.0
    %99 = vmatprep.subr.mxu0 0.0
    %100 = vmatpush2.xpose.msra.mxu0 0.0
    %101 = vmatprep.subr.mxu0 0.0
    %102 = vmatpush2.xpose.msra.mxu0 0.0
    %103 = vmatprep.subr.mxu0 0.0
    %104 = vmatpush2.xpose.msra.mxu0 0.0
    %105 = vmatprep.subr.mxu0 0.0
    %106 = vmatpush2.xpose.msra.mxu0 0.0
    %107 = vmatprep.subr.mxu0 0.0
    %108 = vmatpush2.xpose.msra.mxu0 0.0
    %109 = vmatprep.subr.mxu0 0.0
    %110 = vmatpush2.xpose.msra.mxu0 0.0
    %111 = vmatprep.subr.mxu0 0.0
    %112 = vmatpush2.xpose.msra.mxu0 0.0
    %113 = vmatprep.subr.mxu0 0.0
    %114 = vmatpush2.xpose.msra.mxu0 0.0
    %115 = vmatprep.subr.mxu0 0.0
    %116 = vmatpush2.xpose.msra.mxu0 0.0
    %117 = vmatprep.subr.mxu0 0.0
    %118 = vmatpush2.xpose.msra.mxu0 0.0
    %119 = vmatprep.subr.mxu0 0.0
    %120 = vmatpush2.xpose.msra.mxu0 0.0
    %121 = vmatprep.subr.mxu0 0.0
    %122 = vmatpush2.xpose.msra.mxu0 0.0
    %123 = vmatprep.subr.mxu0 0.0
    %124 = vmatpush2.xpose.msra.mxu0 0.0
    %125 = vmatprep.mubr.f32.mxu0 0.0
    %126 = vmatmul.mubr.f32.gmra.mxu0 %v53
    %v127 = vpop.f32.mrf.mxu0
    %v128 = vadd.f32 %v49, %v127
    %v129 = vpop.f32.mrf.mxu0
    %130 = vdwg.mxu0
    %vm131 = vcmask 130048
    %132 = vst.msk [vmem:[#allocation7] sm:$0xff] %vm131, %v128
    // Predicated region
    $region22: #{tpu_custom_call.1} parent=1 // pred_check
      _
    $region23: #{tpu_custom_call.1} parent=1 // pred_check_branch
      %134 = sbr.rel (0) target = $region25
    $region24: #{tpu_custom_call.1} parent=1 // pred_region
      %s136 = ssub.s32 128, 128
      %137 = vsyncadd [#allocation4], %s136
      %s139 = sshll.u32 [#allocation7], 4
      %s140 = int_to_ptr.vmem [resolvable:$true] %s139
      %142 = dma.vmem_to_hbm [thread:$0]  %s140, 128, %s3, [#allocation4]
    $region25: #{tpu_custom_call.1} parent=1 // pred_fallthru
      _
    // Predicated region
    $region26: #{tpu_custom_call.1} parent=1 // pred_check
      _
    $region27: #{tpu_custom_call.1} parent=1 // pred_check_branch
      %144 = sbr.rel (0) target = $region29
    $region28: #{tpu_custom_call.1} parent=1 // pred_region
      %145 = dma.done [#allocation4], 128
    $region29: #{tpu_custom_call.1} parent=1 // pred_fallthru
      _
    %146 = vsyncpa [#allocation3], 1
    %147 = vsyncpa [#allocation6], 1
    %148 = vsyncpa [#allocation4], 1

</llo_original>
